<compile_context>
chip_gen: v7x
topology: tpu7x:2x2x1
jax: 0.10.0
libtpu: 0.0.40
codegen_flags: <defaults>
</compile_context>

<pallas_src>
import functools

import jax
import jax.numpy as jnp
from jax.experimental import pallas as pl
from jax.experimental.pallas import tpu as pltpu

LANE = 128        # lane width: pad every feature dim to a multiple of this
TILE_B = 128      # batch rows per grid step (multiple of 8 sublanes)


def _round_up(n: int, m: int) -> int:
    return ((n + m - 1) // m) * m


def _make_encoder_kernel(compute_dtype):
    """Fused 3-layer MLP encoder: relu(relu(relu(x@W1+b1)@W2+b2)@W3+b3)."""

    def kernel(x_ref, w1_ref, b1_ref, w2_ref, b2_ref, w3_ref, b3_ref, out_ref):
        # Layer 1 (MXU matmul, f32 accumulate) + bias + ReLU (VPU filler).
        h = jnp.dot(x_ref[...].astype(compute_dtype), w1_ref[...],
                    preferred_element_type=jnp.float32)
        h = jnp.maximum(h + b1_ref[...], 0.0)
        # Layer 2.
        h = jnp.dot(h.astype(compute_dtype), w2_ref[...],
                    preferred_element_type=jnp.float32)
        h = jnp.maximum(h + b2_ref[...], 0.0)
        # Layer 3 + the outer F.relu from Encoder.forward().
        h = jnp.dot(h.astype(compute_dtype), w3_ref[...],
                    preferred_element_type=jnp.float32)
        h = jnp.maximum(h + b3_ref[...], 0.0)
        out_ref[...] = h.astype(out_ref.dtype)

    return kernel


def prepare_encoder_params(w1, b1, w2, b2, w3, b3,
                           *, compute_dtype=jnp.float32, lane=LANE):
    """One-time packing of PyTorch-layout params.

    Transposes each [out, in] weight to [in, out] (so the kernel does x @ W)
    and zero-pads every feature dim up to a multiple of `lane`.  Done once at
    parameter-load time, NOT per forward call.
    """

    def pack_w(w):
        out_d, in_d = w.shape
        wt = jnp.asarray(w, compute_dtype).T                     # [in, out]
        return jnp.pad(wt, ((0, _round_up(in_d, lane) - in_d),
                            (0, _round_up(out_d, lane) - out_d)))

    def pack_b(b):
        (out_d,) = b.shape
        bb = jnp.asarray(b, jnp.float32).reshape(1, out_d)
        return jnp.pad(bb, ((0, 0), (0, _round_up(out_d, lane) - out_d)))

    packed = (pack_w(w1), pack_b(b1),
              pack_w(w2), pack_b(b2),
              pack_w(w3), pack_b(b3))
    out_dim = int(w3.shape[0])       # true (unpadded) output feature dim
    return packed, out_dim


@functools.partial(jax.jit,
                   static_argnames=("out_dim", "tile_b", "compute_dtype"))
def encoder_forward(x, packed, *, out_dim, tile_b=TILE_B,
                    compute_dtype=jnp.float32):
    """x: [B, D_in] float32.  packed: output of prepare_encoder_params."""
    w1, b1, w2, b2, w3, b3 = packed
    B, D = x.shape
    d_pad = w1.shape[0]
    h3_pad = w3.shape[1]

    # Pad batch to the tile size and features to the padded lane width.
    b_pad = _round_up(B, tile_b)
    xp = jnp.pad(x, ((0, b_pad - B), (0, d_pad - D)))
    n_tiles = b_pad // tile_b

    const0 = lambda i: (0, 0)   # weights / biases: same block every grid step

    flops = 2 * b_pad * (w1.shape[0] * w1.shape[1]
                         + w2.shape[0] * w2.shape[1]
                         + w3.shape[0] * w3.shape[1])
    bytes_accessed = (xp.size * xp.dtype.itemsize
                      + b_pad * h3_pad * x.dtype.itemsize
                      + sum(a.size * a.dtype.itemsize
                            for a in (w1, b1, w2, b2, w3, b3)))

    out_pad = pl.pallas_call(
        _make_encoder_kernel(compute_dtype),
        out_shape=jax.ShapeDtypeStruct((b_pad, h3_pad), x.dtype),
        grid_spec=pltpu.PrefetchScalarGridSpec(
            num_scalar_prefetch=0,
            grid=(n_tiles,),
            in_specs=[
                pl.BlockSpec((tile_b, d_pad), lambda i: (i, 0)),   # x tile
                pl.BlockSpec(w1.shape, const0),                    # W1 resident
                pl.BlockSpec(b1.shape, const0),                    # b1
                pl.BlockSpec(w2.shape, const0),                    # W2 resident
                pl.BlockSpec(b2.shape, const0),                    # b2
                pl.BlockSpec(w3.shape, const0),                    # W3 resident
                pl.BlockSpec(b3.shape, const0),                    # b3
            ],
            out_specs=pl.BlockSpec((tile_b, h3_pad), lambda i: (i, 0)),
        ),
        compiler_params=pltpu.CompilerParams(
            dimension_semantics=("parallel",),        # shard batch across TCs
            vmem_limit_bytes=64 * 1024 * 1024,        # fits v5e/v6e/v7x budgets
        ),
        cost_estimate=pl.CostEstimate(flops=flops, transcendentals=0,
                                      bytes_accessed=bytes_accessed),
    )(xp, w1, b1, w2, b2, w3, b3)

    return out_pad[:B, :out_dim]


def encoder_reference(x, w1, b1, w2, b2, w3, b3):
    """Pure-JAX reference mirroring the PyTorch Encoder (nn.Linear layout)."""
    h = jnp.maximum(x @ w1.T + b1, 0.0)
    h = jnp.maximum(h @ w2.T + b2, 0.0)
    h = h @ w3.T + b3
    return jnp.maximum(h, 0.0)


if __name__ == "__main__":
    key = jax.random.PRNGKey(0)
    kx, k1, kb1, k2, kb2, k3, kb3 = jax.random.split(key, 7)

    # Small shapes consistent with Encoder(D_in, theta).
    B, D_in, theta = 16, 32, 16
    H1, H2, H3 = D_in + theta, D_in + 2 * theta, D_in + 3 * theta  # 48, 64, 80

    x = jax.random.normal(kx, (B, D_in), dtype=jnp.float32)
    # Parameters in PyTorch nn.Linear layout: weight [out, in], bias [out].
    w1 = jax.random.normal(k1, (H1, D_in), dtype=jnp.float32) * 0.1
    b1 = jax.random.normal(kb1, (H1,), dtype=jnp.float32) * 0.1
    w2 = jax.random.normal(k2, (H2, H1), dtype=jnp.float32) * 0.1
    b2 = jax.random.normal(kb2, (H2,), dtype=jnp.float32) * 0.1
    w3 = jax.random.normal(k3, (H3, H2), dtype=jnp.float32) * 0.1
    b3 = jax.random.normal(kb3, (H3,), dtype=jnp.float32) * 0.1

    # One-time parameter packing (transpose + pad); reused every forward call.
    packed, out_dim = prepare_encoder_params(w1, b1, w2, b2, w3, b3,
                                             compute_dtype=jnp.float32)

    out = encoder_forward(x, packed, out_dim=out_dim)
    out = jax.block_until_ready(out)

    ref = encoder_reference(x, w1, b1, w2, b2, w3, b3)
    assert out.shape == (B, H3), out.shape
    err = float(jnp.abs(out - ref).max())
    assert jnp.allclose(out, ref, atol=1e-4, rtol=1e-4), err

    print("KERNEL_OK")
</pallas_src>

<mosaic_0001>
module attributes {stable_mosaic.version = 11 : i64} {
  func.func @kernel(%arg0: i32, %arg1: memref<128x128xf32, #tpu.memory_space<vmem>>, %arg2: memref<128x128xf32, #tpu.memory_space<vmem>>, %arg3: memref<1x128xf32, #tpu.memory_space<vmem>>, %arg4: memref<128x128xf32, #tpu.memory_space<vmem>>, %arg5: memref<1x128xf32, #tpu.memory_space<vmem>>, %arg6: memref<128x128xf32, #tpu.memory_space<vmem>>, %arg7: memref<1x128xf32, #tpu.memory_space<vmem>>, %arg8: memref<128x128xf32, #tpu.memory_space<vmem>>) attributes {dimension_semantics = [#tpu.dimension_semantics<parallel>], iteration_bounds = array<i64: 1>, scalar_prefetch = 0 : i64, scratch_operands = 0 : i64, tpu.core_type = #tpu.core_type<tc>, window_params = [{transform_indices = @transform_0, window_bounds = array<i64: 128, 128>}, {pipeline_mode = #tpu.pipeline_mode<synchronous>, transform_indices = @transform_1, window_bounds = array<i64: 128, 128>}, {pipeline_mode = #tpu.pipeline_mode<synchronous>, transform_indices = @transform_2, window_bounds = array<i64: 1, 128>}, {pipeline_mode = #tpu.pipeline_mode<synchronous>, transform_indices = @transform_3, window_bounds = array<i64: 128, 128>}, {pipeline_mode = #tpu.pipeline_mode<synchronous>, transform_indices = @transform_4, window_bounds = array<i64: 1, 128>}, {pipeline_mode = #tpu.pipeline_mode<synchronous>, transform_indices = @transform_5, window_bounds = array<i64: 128, 128>}, {pipeline_mode = #tpu.pipeline_mode<synchronous>, transform_indices = @transform_6, window_bounds = array<i64: 1, 128>}, {transform_indices = @transform_7, window_bounds = array<i64: 128, 128>}]} {
    %c0 = arith.constant 0 : index
    %c0_0 = arith.constant 0 : index
    %0 = vector.load %arg1[%c0, %c0_0] : memref<128x128xf32, #tpu.memory_space<vmem>>, vector<128x128xf32>
    %c0_1 = arith.constant 0 : index
    %c0_2 = arith.constant 0 : index
    %1 = vector.load %arg2[%c0_1, %c0_2] : memref<128x128xf32, #tpu.memory_space<vmem>>, vector<128x128xf32>
    %cst = arith.constant dense<0.000000e+00> : vector<128x128xf32>
    %2 = tpu.matmul %0, %1, %cst {dimension_numbers = #tpu.dot_dimension_numbers<[1], [0], [0], [1], [0, 0, 1, 1], [], []>} : vector<128x128xf32>, vector<128x128xf32>, vector<128x128xf32> -> vector<128x128xf32>
    %c0_3 = arith.constant 0 : index
    %c0_4 = arith.constant 0 : index
    %3 = vector.load %arg3[%c0_3, %c0_4] : memref<1x128xf32, #tpu.memory_space<vmem>>, vector<1x128xf32>
    %4 = vector.broadcast %3 : vector<1x128xf32> to vector<128x128xf32>
    %5 = arith.addf %2, %4 : vector<128x128xf32>
    %cst_5 = arith.constant 0.000000e+00 : f32
    %6 = vector.broadcast %cst_5 : f32 to vector<128x128xf32>
    %7 = arith.maximumf %5, %6 : vector<128x128xf32>
    %c0_6 = arith.constant 0 : index
    %c0_7 = arith.constant 0 : index
    %8 = vector.load %arg4[%c0_6, %c0_7] : memref<128x128xf32, #tpu.memory_space<vmem>>, vector<128x128xf32>
    %cst_8 = arith.constant dense<0.000000e+00> : vector<128x128xf32>
    %9 = tpu.matmul %7, %8, %cst_8 {dimension_numbers = #tpu.dot_dimension_numbers<[1], [0], [0], [1], [0, 0, 1, 1], [], []>} : vector<128x128xf32>, vector<128x128xf32>, vector<128x128xf32> -> vector<128x128xf32>
    %c0_9 = arith.constant 0 : index
    %c0_10 = arith.constant 0 : index
    %10 = vector.load %arg5[%c0_9, %c0_10] : memref<1x128xf32, #tpu.memory_space<vmem>>, vector<1x128xf32>
    %11 = vector.broadcast %10 : vector<1x128xf32> to vector<128x128xf32>
    %12 = arith.addf %9, %11 : vector<128x128xf32>
    %cst_11 = arith.constant 0.000000e+00 : f32
    %13 = vector.broadcast %cst_11 : f32 to vector<128x128xf32>
    %14 = arith.maximumf %12, %13 : vector<128x128xf32>
    %c0_12 = arith.constant 0 : index
    %c0_13 = arith.constant 0 : index
    %15 = vector.load %arg6[%c0_12, %c0_13] : memref<128x128xf32, #tpu.memory_space<vmem>>, vector<128x128xf32>
    %cst_14 = arith.constant dense<0.000000e+00> : vector<128x128xf32>
    %16 = tpu.matmul %14, %15, %cst_14 {dimension_numbers = #tpu.dot_dimension_numbers<[1], [0], [0], [1], [0, 0, 1, 1], [], []>} : vector<128x128xf32>, vector<128x128xf32>, vector<128x128xf32> -> vector<128x128xf32>
    %c0_15 = arith.constant 0 : index
    %c0_16 = arith.constant 0 : index
    %17 = vector.load %arg7[%c0_15, %c0_16] : memref<1x128xf32, #tpu.memory_space<vmem>>, vector<1x128xf32>
    %18 = vector.broadcast %17 : vector<1x128xf32> to vector<128x128xf32>
    %19 = arith.addf %16, %18 : vector<128x128xf32>
    %cst_17 = arith.constant 0.000000e+00 : f32
    %20 = vector.broadcast %cst_17 : f32 to vector<128x128xf32>
    %21 = arith.maximumf %19, %20 : vector<128x128xf32>
    %c0_18 = arith.constant 0 : index
    %c0_19 = arith.constant 0 : index
    %22 = vector.load %arg8[%c0_18, %c0_19] : memref<128x128xf32, #tpu.memory_space<vmem>>, vector<128x128xf32>
    tpu.vector_store %arg8[%c0_18, %c0_19], %21 {strides = array<i32>} : memref<128x128xf32, #tpu.memory_space<vmem>>, vector<128x128xf32>,
    return
  }
  func.func @transform_0(%arg0: i32) -> (i32, i32) {
    %c0_i32 = arith.constant 0 : i32
    %c0_i32_0 = arith.constant 0 : i32
    return %arg0, %c0_i32 : i32, i32
  }
  func.func @transform_1(%arg0: i32) -> (i32, i32) {
    %c0_i32 = arith.constant 0 : i32
    %c0_i32_0 = arith.constant 0 : i32
    %c0_i32_1 = arith.constant 0 : i32
    return %c0_i32, %c0_i32_0 : i32, i32
  }
  func.func @transform_2(%arg0: i32) -> (i32, i32) {
    %c0_i32 = arith.constant 0 : i32
    %c0_i32_0 = arith.constant 0 : i32
    %c0_i32_1 = arith.constant 0 : i32
    return %c0_i32, %c0_i32_0 : i32, i32
  }
  func.func @transform_3(%arg0: i32) -> (i32, i32) {
    %c0_i32 = arith.constant 0 : i32
    %c0_i32_0 = arith.constant 0 : i32
    %c0_i32_1 = arith.constant 0 : i32
    return %c0_i32, %c0_i32_0 : i32, i32
  }
  func.func @transform_4(%arg0: i32) -> (i32, i32) {
    %c0_i32 = arith.constant 0 : i32
    %c0_i32_0 = arith.constant 0 : i32
    %c0_i32_1 = arith.constant 0 : i32
    return %c0_i32, %c0_i32_0 : i32, i32
  }
  func.func @transform_5(%arg0: i32) -> (i32, i32) {
    %c0_i32 = arith.constant 0 : i32
    %c0_i32_0 = arith.constant 0 : i32
    %c0_i32_1 = arith.constant 0 : i32
    return %c0_i32, %c0_i32_0 : i32, i32
  }
  func.func @transform_6(%arg0: i32) -> (i32, i32) {
    %c0_i32 = arith.constant 0 : i32
    %c0_i32_0 = arith.constant 0 : i32
    %c0_i32_1 = arith.constant 0 : i32
    return %c0_i32, %c0_i32_0 : i32, i32
  }
  func.func @transform_7(%arg0: i32) -> (i32, i32) {
    %c0_i32 = arith.constant 0 : i32
    %c0_i32_0 = arith.constant 0 : i32
    return %arg0, %c0_i32 : i32, i32
  }
}

</mosaic_0001>

<llo_original>
// kernel: encoder_forward.1
$region0: #{encoder_forward.1}
  #allocation0 [shape = 'u32[]', space=smem, size = 0x4, offset = 0x4, fixed_abs, tag = 'smem constant byte address 0x4 - core index']
  #allocation1 [shape = 'u32[144,128]{1,0:T(1,128)}', space=vmem, size = 0x12000, scoped, tag = 'internal scratch']
  %s0 = inlined_call_operand.hbm [shape: f32[128,128], index: 0, kind: input, shape index: {}]
  %s1 = inlined_call_operand.hbm [shape: f32[128,128], index: 1, kind: input, shape index: {}]
  %s2 = inlined_call_operand.hbm [shape: f32[1,128], index: 2, kind: input, shape index: {}]
  %s3 = inlined_call_operand.hbm [shape: f32[128,128], index: 3, kind: input, shape index: {}]
  %s4 = inlined_call_operand.hbm [shape: f32[1,128], index: 4, kind: input, shape index: {}]
  %s5 = inlined_call_operand.hbm [shape: f32[128,128], index: 5, kind: input, shape index: {}]
  %s6 = inlined_call_operand.hbm [shape: f32[1,128], index: 6, kind: input, shape index: {}]
  %s7 = inlined_call_operand.hbm [shape: f32[128,128], index: 7, kind: output, shape index: {}]
  %s8 = sld [smem:[#allocation0]]
  $region66: #{encoder_forward.1} parent=0
    _
  %s10 = ssub.s32 1, %s8
  %s11 = scalar_select 0, %s10, %s8
  $region1: #{encoder_forward.1} parent=0
    #allocation2 [shape = 'u8[65536]{0}', space=vmem, size = 0x10000, scoped, tag = 'input window, operand 0, single buffered']
    #allocation3 [shape = 's32[1]{0}', space=sflag, size = 0x4, scoped, tag = 'scoped memory for encoder_forward.1']
    #allocation4 [shape = 's32[1]{0}', space=sflag, size = 0x4, scoped, tag = 'scoped memory for encoder_forward.1']
    #allocation5 [shape = 'u8[65536]{0}', space=vmem, size = 0x10000, scoped, tag = 'input window, operand 1, single buffered']
    #allocation6 [shape = 's32[1]{0}', space=sflag, size = 0x4, scoped, tag = 'scoped memory for encoder_forward.1']
    #allocation7 [shape = 'u8[512]{0}', space=vmem, size = 0x400, scoped, tag = 'input window, operand 2, single buffered']
    #allocation8 [shape = 'u8[65536]{0}', space=vmem, size = 0x10000, scoped, tag = 'input window, operand 3, single buffered']
    #allocation9 [shape = 's32[1]{0}', space=sflag, size = 0x4, scoped, tag = 'scoped memory for encoder_forward.1']
    #allocation10 [shape = 'u8[512]{0}', space=vmem, size = 0x400, scoped, tag = 'input window, operand 4, single buffered']
    #allocation11 [shape = 'u8[65536]{0}', space=vmem, size = 0x10000, scoped, tag = 'input window, operand 5, single buffered']
    #allocation12 [shape = 's32[1]{0}', space=sflag, size = 0x4, scoped, tag = 'scoped memory for encoder_forward.1']
    #allocation13 [shape = 'u8[512]{0}', space=vmem, size = 0x400, scoped, tag = 'input window, operand 6, single buffered']
    #allocation14 [shape = 'u8[65536]{0}', space=vmem, size = 0x10000, scoped, tag = 'output window, operand 0, single buffered']
    %12 = vsyncpa [#allocation3], 0
    %13 = vsyncpa [#allocation6], 0
    %14 = vsyncpa [#allocation9], 0
    %15 = vsyncpa [#allocation12], 0
    %16 = vsyncpa [#allocation4], 0
    // Predicated region
    $region2: #{encoder_forward.1} parent=1 // pred_check
      _
    $region3: #{encoder_forward.1} parent=1 // pred_check_branch
      %18 = sbr.rel (0) target = $region5
    $region4: #{encoder_forward.1} parent=1 // pred_region
      %s20 = ssub.s32 2048, 2048
      %21 = vsyncadd [#allocation3], %s20
      %s22 = sshll.u32 [#allocation2], 4
      %s23 = int_to_ptr.vmem [resolvable:$true] %s22
      %28 = dma.hbm_to_vmem [thread:$0]  %s0, 2048, %s23, [#allocation3], 128, 128, 8
    $region5: #{encoder_forward.1} parent=1 // pred_fallthru
      _
    // Predicated region
    $region6: #{encoder_forward.1} parent=1 // pred_check
      _
    $region7: #{encoder_forward.1} parent=1 // pred_check_branch
      %30 = sbr.rel (0) target = $region9
    $region8: #{encoder_forward.1} parent=1 // pred_region
      %s32 = ssub.s32 2048, 2048
      %33 = vsyncadd [#allocation6], %s32
      %s34 = sshll.u32 [#allocation5], 4
      %s35 = int_to_ptr.vmem [resolvable:$true] %s34
      %40 = dma.hbm_to_vmem [thread:$0]  %s1, 2048, %s35, [#allocation6], 128, 128, 8
    $region9: #{encoder_forward.1} parent=1 // pred_fallthru
      _
    // Predicated region
    $region10: #{encoder_forward.1} parent=1 // pred_check
      _
    $region11: #{encoder_forward.1} parent=1 // pred_check_branch
      %42 = sbr.rel (0) target = $region13
    $region12: #{encoder_forward.1} parent=1 // pred_region
      %s44 = ssub.s32 16, 16
      %45 = vsyncadd [#allocation6], %s44
      %s47 = sshll.u32 [#allocation7], 4
      %s48 = int_to_ptr.vmem [resolvable:$true] %s47
      %50 = dma.hbm_to_vmem [thread:$0]  %s2, 16, %s48, [#allocation6]
    $region13: #{encoder_forward.1} parent=1 // pred_fallthru
      _
    // Predicated region
    $region14: #{encoder_forward.1} parent=1 // pred_check
      _
    $region15: #{encoder_forward.1} parent=1 // pred_check_branch
      %52 = sbr.rel (0) target = $region17
    $region16: #{encoder_forward.1} parent=1 // pred_region
      %s54 = ssub.s32 2048, 2048
      %55 = vsyncadd [#allocation9], %s54
      %s56 = sshll.u32 [#allocation8], 4
      %s57 = int_to_ptr.vmem [resolvable:$true] %s56
      %62 = dma.hbm_to_vmem [thread:$0]  %s3, 2048, %s57, [#allocation9], 128, 128, 8
    $region17: #{encoder_forward.1} parent=1 // pred_fallthru
      _
    // Predicated region
    $region18: #{encoder_forward.1} parent=1 // pred_check
      _
    $region19: #{encoder_forward.1} parent=1 // pred_check_branch
      %64 = sbr.rel (0) target = $region21
    $region20: #{encoder_forward.1} parent=1 // pred_region
      %s66 = ssub.s32 16, 16
      %67 = vsyncadd [#allocation9], %s66
      %s69 = sshll.u32 [#allocation10], 4
      %s70 = int_to_ptr.vmem [resolvable:$true] %s69
      %72 = dma.hbm_to_vmem [thread:$0]  %s4, 16, %s70, [#allocation9]
    $region21: #{encoder_forward.1} parent=1 // pred_fallthru
      _
    // Predicated region
    $region22: #{encoder_forward.1} parent=1 // pred_check
      _
    $region23: #{encoder_forward.1} parent=1 // pred_check_branch
      %74 = sbr.rel (0) target = $region25
    $region24: #{encoder_forward.1} parent=1 // pred_region
      %s76 = ssub.s32 2048, 2048
      %77 = vsyncadd [#allocation12], %s76
      %s78 = sshll.u32 [#allocation11], 4
      %s79 = int_to_ptr.vmem [resolvable:$true] %s78
      %84 = dma.hbm_to_vmem [thread:$0]  %s5, 2048, %s79, [#allocation12], 128, 128, 8
    $region25: #{encoder_forward.1} parent=1 // pred_fallthru
      _
    // Predicated region
    $region26: #{encoder_forward.1} parent=1 // pred_check
      _
    $region27: #{encoder_forward.1} parent=1 // pred_check_branch
      %86 = sbr.rel (0) target = $region29
    $region28: #{encoder_forward.1} parent=1 // pred_region
      %s88 = ssub.s32 16, 16
      %89 = vsyncadd [#allocation12], %s88
      %s91 = sshll.u32 [#allocation13], 4
      %s92 = int_to_ptr.vmem [resolvable:$true] %s91
      %94 = dma.hbm_to_vmem [thread:$0]  %s6, 16, %s92, [#allocation12]
    $region29: #{encoder_forward.1} parent=1 // pred_fallthru
      _
    // Predicated region
    $region30: #{encoder_forward.1} parent=1 // pred_check
      _
    $region31: #{encoder_forward.1} parent=1 // pred_check_branch
      %96 = sbr.rel (0) target = $region33
    $region32: #{encoder_forward.1} parent=1 // pred_region
      %97 = dma.done [#allocation3], 2048
    $region33: #{encoder_forward.1} parent=1 // pred_fallthru
      _
    // Predicated region
    $region34: #{encoder_forward.1} parent=1 // pred_check
      _
    $region35: #{encoder_forward.1} parent=1 // pred_check_branch
      %99 = sbr.rel (0) target = $region37
    $region36: #{encoder_forward.1} parent=1 // pred_region
      %100 = dma.done [#allocation6], 2048
    $region37: #{encoder_forward.1} parent=1 // pred_fallthru
      _
    // Predicated region
    $region38: #{encoder_forward.1} parent=1 // pred_check
      _
    $region39: #{encoder_forward.1} parent=1 // pred_check_branch
      %102 = sbr.rel (0) target = $region41
    $region40: #{encoder_forward.1} parent=1 // pred_region
      %103 = dma.done [#allocation6], 16
    $region41: #{encoder_forward.1} parent=1 // pred_fallthru
      _
    // Predicated region
    $region42: #{encoder_forward.1} parent=1 // pred_check
      _
    $region43: #{encoder_forward.1} parent=1 // pred_check_branch
      %105 = sbr.rel (0) target = $region45
    $region44: #{encoder_forward.1} parent=1 // pred_region
      %106 = dma.done [#allocation9], 2048
    $region45: #{encoder_forward.1} parent=1 // pred_fallthru
      _
    // Predicated region
    $region46: #{encoder_forward.1} parent=1 // pred_check
      _
    $region47: #{encoder_forward.1} parent=1 // pred_check_branch
      %108 = sbr.rel (0) target = $region49
    $region48: #{encoder_forward.1} parent=1 // pred_region
      %109 = dma.done [#allocation9], 16
    $region49: #{encoder_forward.1} parent=1 // pred_fallthru
      _
    // Predicated region
    $region50: #{encoder_forward.1} parent=1 // pred_check
      _
    $region51: #{encoder_forward.1} parent=1 // pred_check_branch
      %111 = sbr.rel (0) target = $region53
    $region52: #{encoder_forward.1} parent=1 // pred_region
      %112 = dma.done [#allocation12], 2048
    $region53: #{encoder_forward.1} parent=1 // pred_fallthru
      _
    // Predicated region
    $region54: #{encoder_forward.1} parent=1 // pred_check
      _
    $region55: #{encoder_forward.1} parent=1 // pred_check_branch
      %114 = sbr.rel (0) target = $region57
    $region56: #{encoder_forward.1} parent=1 // pred_region
      %115 = dma.done [#allocation12], 16
    $region57: #{encoder_forward.1} parent=1 // pred_fallthru
      _
    %v116 = vld [vmem:[#allocation2] sm:$0xff]
    %v117 = vld [vmem:[#allocation2 + $0x8] sm:$0xff]
    %v118 = vld [vmem:[#allocation2 + $0x10] sm:$0xff]
    %v119 = vld [vmem:[#allocation2 + $0x18] sm:$0xff]
    %v120 = vld [vmem:[#allocation2 + $0x20] sm:$0xff]
    %v121 = vld [vmem:[#allocation2 + $0x28] sm:$0xff]
    %v122 = vld [vmem:[#allocation2 + $0x30] sm:$0xff]
    %v123 = vld [vmem:[#allocation2 + $0x38] sm:$0xff]
    %v124 = vld [vmem:[#allocation2 + $0x40] sm:$0xff]
    %v125 = vld [vmem:[#allocation2 + $0x48] sm:$0xff]
    %v126 = vld [vmem:[#allocation2 + $0x50] sm:$0xff]
    %v127 = vld [vmem:[#allocation2 + $0x58] sm:$0xff]
    %v128 = vld [vmem:[#allocation2 + $0x60] sm:$0xff]
    %v129 = vld [vmem:[#allocation2 + $0x68] sm:$0xff]
    %v130 = vld [vmem:[#allocation2 + $0x70] sm:$0xff]
    %v131 = vld [vmem:[#allocation2 + $0x78] sm:$0xff]
    %v132 = vld [vmem:[#allocation5] sm:$0xff]
    %v133 = vld [vmem:[#allocation5 + $0x8] sm:$0xff]
    %v134 = vld [vmem:[#allocation5 + $0x10] sm:$0xff]
    %v135 = vld [vmem:[#allocation5 + $0x18] sm:$0xff]
    %v136 = vld [vmem:[#allocation5 + $0x20] sm:$0xff]
    %v137 = vld [vmem:[#allocation5 + $0x28] sm:$0xff]
    %v138 = vld [vmem:[#allocation5 + $0x30] sm:$0xff]
    %v139 = vld [vmem:[#allocation5 + $0x38] sm:$0xff]
    %v140 = vld [vmem:[#allocation5 + $0x40] sm:$0xff]
    %v141 = vld [vmem:[#allocation5 + $0x48] sm:$0xff]
    %v142 = vld [vmem:[#allocation5 + $0x50] sm:$0xff]
    %v143 = vld [vmem:[#allocation5 + $0x58] sm:$0xff]
    %v144 = vld [vmem:[#allocation5 + $0x60] sm:$0xff]
    %v145 = vld [vmem:[#allocation5 + $0x68] sm:$0xff]
    %v146 = vld [vmem:[#allocation5 + $0x70] sm:$0xff]
    %v147 = vld [vmem:[#allocation5 + $0x78] sm:$0xff]
    %v148 = vld [vmem:[#allocation7] sm:$0x1]
    %v150 = vlaneseq
    %v151 = vshrl.u32 %v150, 7
    %v152 = vsub.s32 0, %v151
    %v153 = vrot.slane %v148, %v152
    %155 = vmatprep.subr.mxu0 0.0
    %156 = vmatpush1.msra.mxu0 %v132
    %157 = vmatprep.subr.mxu0 0.0
    %158 = vmatpush1.msra.mxu0 %v133
    %159 = vmatprep.subr.mxu0 0.0
    %160 = vmatpush1.msra.mxu0 %v134
    %161 = vmatprep.subr.mxu0 0.0
    %162 = vmatpush1.msra.mxu0 %v135
    %163 = vmatprep.subr.mxu0 0.0
    %164 = vmatpush1.msra.mxu0 %v136
    %165 = vmatprep.subr.mxu0 0.0
    %166 = vmatpush1.msra.mxu0 %v137
    %167 = vmatprep.subr.mxu0 0.0
    %168 = vmatpush1.msra.mxu0 %v138
    %169 = vmatprep.subr.mxu0 0.0
    %170 = vmatpush1.msra.mxu0 %v139
    %171 = vmatprep.subr.mxu0 0.0
    %172 = vmatpush1.msra.mxu0 %v140
    %173 = vmatprep.subr.mxu0 0.0
    %174 = vmatpush1.msra.mxu0 %v141
    %175 = vmatprep.subr.mxu0 0.0
    %176 = vmatpush1.msra.mxu0 %v142
    %177 = vmatprep.subr.mxu0 0.0
    %178 = vmatpush1.msra.mxu0 %v143
    %179 = vmatprep.subr.mxu0 0.0
    %180 = vmatpush1.msra.mxu0 %v144
    %181 = vmatprep.subr.mxu0 0.0
    %182 = vmatpush1.msra.mxu0 %v145
    %183 = vmatprep.subr.mxu0 0.0
    %184 = vmatpush1.msra.mxu0 %v146
    %185 = vmatprep.subr.mxu0 0.0
    %186 = vmatpush1.msra.mxu0 %v147
    %187 = vmatprep.subr.mxu0 0.0
    %188 = vmatpush1.msra.mxu0 0.0
    %189 = vmatprep.subr.mxu0 0.0
    %190 = vmatpush1.msra.mxu0 0.0
    %191 = vmatprep.subr.mxu0 0.0
    %192 = vmatpush1.msra.mxu0 0.0
    %193 = vmatprep.subr.mxu0 0.0
    %194 = vmatpush1.msra.mxu0 0.0
    %195 = vmatprep.subr.mxu0 0.0
    %196 = vmatpush1.msra.mxu0 0.0
    %197 = vmatprep.subr.mxu0 0.0
    %198 = vmatpush1.msra.mxu0 0.0
    %199 = vmatprep.subr.mxu0 0.0
    %200 = vmatpush1.msra.mxu0 0.0
    %201 = vmatprep.subr.mxu0 0.0
    %202 = vmatpush1.msra.mxu0 0.0
    %203 = vmatprep.subr.mxu0 0.0
    %204 = vmatpush1.msra.mxu0 0.0
    %205 = vmatprep.subr.mxu0 0.0
    %206 = vmatpush1.msra.mxu0 0.0
    %207 = vmatprep.subr.mxu0 0.0
    %208 = vmatpush1.msra.mxu0 0.0
    %209 = vmatprep.subr.mxu0 0.0
    %210 = vmatpush1.msra.mxu0 0.0
    %211 = vmatprep.subr.mxu0 0.0
    %212 = vmatpush1.msra.mxu0 0.0
    %213 = vmatprep.subr.mxu0 0.0
    %214 = vmatpush1.msra.mxu0 0.0
    %215 = vmatprep.subr.mxu0 0.0
    %216 = vmatpush1.msra.mxu0 0.0
    %217 = vmatprep.subr.mxu0 0.0
    %218 = vmatpush1.msra.mxu0 0.0
    %219 = vmatprep.mubr.f32.mxu0 0.0
    %220 = vmatmul.mubr.f32.gmra.mrb[0].mxu0 %v116
    %v221 = vpop.f32.mrb[0].mxu0
    %v222 = vadd.f32 %v153, %v221
    %v223 = vpop.f32.mrb[0].mxu0
    %224 = vmatprep.mubr.f32.mxu0 0.0
    %225 = vmatmul.mubr.f32.gmra.mrb[0].mxu0 %v117
    %v226 = vpop.f32.mrb[0].mxu0
    %v227 = vadd.f32 %v153, %v226
    %v228 = vpop.f32.mrb[0].mxu0
    %229 = vmatprep.mubr.f32.mxu0 0.0
    %230 = vmatmul.mubr.f32.gmra.mrb[0].mxu0 %v118
    %v231 = vpop.f32.mrb[0].mxu0
    %v232 = vadd.f32 %v153, %v231
    %v233 = vpop.f32.mrb[0].mxu0
    %234 = vmatprep.mubr.f32.mxu0 0.0
    %235 = vmatmul.mubr.f32.gmra.mrb[0].mxu0 %v119
    %v236 = vpop.f32.mrb[0].mxu0
    %v237 = vadd.f32 %v153, %v236
    %v238 = vpop.f32.mrb[0].mxu0
    %239 = vmatprep.mubr.f32.mxu0 0.0
    %240 = vmatmul.mubr.f32.gmra.mrb[0].mxu0 %v120
    %v241 = vpop.f32.mrb[0].mxu0
    %v242 = vadd.f32 %v153, %v241
    %v243 = vpop.f32.mrb[0].mxu0
    %244 = vmatprep.mubr.f32.mxu0 0.0
    %245 = vmatmul.mubr.f32.gmra.mrb[0].mxu0 %v121
    %v246 = vpop.f32.mrb[0].mxu0
    %v247 = vadd.f32 %v153, %v246
    %v248 = vpop.f32.mrb[0].mxu0
    %249 = vmatprep.mubr.f32.mxu0 0.0
    %250 = vmatmul.mubr.f32.gmra.mrb[0].mxu0 %v122
    %v251 = vpop.f32.mrb[0].mxu0
    %v252 = vadd.f32 %v153, %v251
    %v253 = vpop.f32.mrb[0].mxu0
    %254 = vmatprep.mubr.f32.mxu0 0.0
    %255 = vmatmul.mubr.f32.gmra.mrb[0].mxu0 %v123
    %v256 = vpop.f32.mrb[0].mxu0
    %v257 = vadd.f32 %v153, %v256
    %v258 = vpop.f32.mrb[0].mxu0
    %259 = vmatprep.mubr.f32.mxu0 0.0
    %260 = vmatmul.mubr.f32.gmra.mrb[0].mxu0 %v124
    %v261 = vpop.f32.mrb[0].mxu0
    %v262 = vadd.f32 %v153, %v261
    %v263 = vpop.f32.mrb[0].mxu0
    %264 = vmatprep.mubr.f32.mxu0 0.0
    %265 = vmatmul.mubr.f32.gmra.mrb[0].mxu0 %v125
    %v266 = vpop.f32.mrb[0].mxu0
    %v267 = vadd.f32 %v153, %v266
    %v268 = vpop.f32.mrb[0].mxu0
    %269 = vmatprep.mubr.f32.mxu0 0.0
    %270 = vmatmul.mubr.f32.gmra.mrb[0].mxu0 %v126
    %v271 = vpop.f32.mrb[0].mxu0
    %v272 = vadd.f32 %v153, %v271
    %v273 = vpop.f32.mrb[0].mxu0
    %274 = vmatprep.mubr.f32.mxu0 0.0
    %275 = vmatmul.mubr.f32.gmra.mrb[0].mxu0 %v127
    %v276 = vpop.f32.mrb[0].mxu0
    %v277 = vadd.f32 %v153, %v276
    %v278 = vpop.f32.mrb[0].mxu0
    %279 = vmatprep.mubr.f32.mxu0 0.0
    %280 = vmatmul.mubr.f32.gmra.mrb[0].mxu0 %v128
    %v281 = vpop.f32.mrb[0].mxu0
    %v282 = vadd.f32 %v153, %v281
    %v283 = vpop.f32.mrb[0].mxu0
    %284 = vmatprep.mubr.f32.mxu0 0.0
    %285 = vmatmul.mubr.f32.gmra.mrb[0].mxu0 %v129
    %v286 = vpop.f32.mrb[0].mxu0
    %v287 = vadd.f32 %v153, %v286
    %v288 = vpop.f32.mrb[0].mxu0
    %289 = vmatprep.mubr.f32.mxu0 0.0
    %290 = vmatmul.mubr.f32.gmra.mrb[0].mxu0 %v130
    %v291 = vpop.f32.mrb[0].mxu0
    %v292 = vadd.f32 %v153, %v291
    %v293 = vpop.f32.mrb[0].mxu0
    %294 = vmatprep.mubr.f32.mxu0 0.0
    %295 = vmatmul.mubr.f32.gmra.mrb[0].mxu0 %v131
    %v296 = vpop.f32.mrb[0].mxu0
    %v297 = vadd.f32 %v153, %v296
    %v298 = vpop.f32.mrb[0].mxu0
    %299 = vdwg.mxu0
    %v300 = vmax.f32 %v222, 0.0
    %v301 = vmax.f32 %v227, 0.0
    %v302 = vmax.f32 %v232, 0.0
    %v303 = vmax.f32 %v237, 0.0
    %v304 = vmax.f32 %v242, 0.0
    %v305 = vmax.f32 %v247, 0.0
    %v306 = vmax.f32 %v252, 0.0
    %v307 = vmax.f32 %v257, 0.0
    %v308 = vmax.f32 %v262, 0.0
    %v309 = vmax.f32 %v267, 0.0
    %v310 = vmax.f32 %v272, 0.0
    %v311 = vmax.f32 %v277, 0.0
    %v312 = vmax.f32 %v282, 0.0
    %v313 = vmax.f32 %v287, 0.0
    %v314 = vmax.f32 %v292, 0.0
    %v315 = vmax.f32 %v297, 0.0
    %v316 = vld [vmem:[#allocation8] sm:$0xff]
    %v317 = vld [vmem:[#allocation8 + $0x8] sm:$0xff]
    %v318 = vld [vmem:[#allocation8 + $0x10] sm:$0xff]
    %v319 = vld [vmem:[#allocation8 + $0x18] sm:$0xff]
    %v320 = vld [vmem:[#allocation8 + $0x20] sm:$0xff]
    %v321 = vld [vmem:[#allocation8 + $0x28] sm:$0xff]
    %v322 = vld [vmem:[#allocation8 + $0x30] sm:$0xff]
    %v323 = vld [vmem:[#allocation8 + $0x38] sm:$0xff]
    %v324 = vld [vmem:[#allocation8 + $0x40] sm:$0xff]
    %v325 = vld [vmem:[#allocation8 + $0x48] sm:$0xff]
    %v326 = vld [vmem:[#allocation8 + $0x50] sm:$0xff]
    %v327 = vld [vmem:[#allocation8 + $0x58] sm:$0xff]
    %v328 = vld [vmem:[#allocation8 + $0x60] sm:$0xff]
    %v329 = vld [vmem:[#allocation8 + $0x68] sm:$0xff]
    %v330 = vld [vmem:[#allocation8 + $0x70] sm:$0xff]
    %v331 = vld [vmem:[#allocation8 + $0x78] sm:$0xff]
    %v332 = vld [vmem:[#allocation10] sm:$0x1]
    %v334 = vlaneseq
    %v335 = vshrl.u32 %v334, 7
    %v336 = vsub.s32 0, %v335
    %v337 = vrot.slane %v332, %v336
    %339 = vmatprep.subr.mxu0 0.0
    %340 = vmatpush1.msra.mxu0 %v316
    %341 = vmatprep.subr.mxu0 0.0
    %342 = vmatpush1.msra.mxu0 %v317
    %343 = vmatprep.subr.mxu0 0.0
    %344 = vmatpush1.msra.mxu0 %v318
    %345 = vmatprep.subr.mxu0 0.0
    %346 = vmatpush1.msra.mxu0 %v319
    %347 = vmatprep.subr.mxu0 0.0
    %348 = vmatpush1.msra.mxu0 %v320
    %349 = vmatprep.subr.mxu0 0.0
    %350 = vmatpush1.msra.mxu0 %v321
    %351 = vmatprep.subr.mxu0 0.0
    %352 = vmatpush1.msra.mxu0 %v322
    %353 = vmatprep.subr.mxu0 0.0
    %354 = vmatpush1.msra.mxu0 %v323
    %355 = vmatprep.subr.mxu0 0.0
    %356 = vmatpush1.msra.mxu0 %v324
    %357 = vmatprep.subr.mxu0 0.0
    %358 = vmatpush1.msra.mxu0 %v325
    %359 = vmatprep.subr.mxu0 0.0
    %360 = vmatpush1.msra.mxu0 %v326
    %361 = vmatprep.subr.mxu0 0.0
    %362 = vmatpush1.msra.mxu0 %v327
    %363 = vmatprep.subr.mxu0 0.0
    %364 = vmatpush1.msra.mxu0 %v328
    %365 = vmatprep.subr.mxu0 0.0
    %366 = vmatpush1.msra.mxu0 %v329
    %367 = vmatprep.subr.mxu0 0.0
    %368 = vmatpush1.msra.mxu0 %v330
    %369 = vmatprep.subr.mxu0 0.0
    %370 = vmatpush1.msra.mxu0 %v331
    %371 = vmatprep.subr.mxu0 0.0
    %372 = vmatpush1.msra.mxu0 0.0
    %373 = vmatprep.subr.mxu0 0.0
    %374 = vmatpush1.msra.mxu0 0.0
    %375 = vmatprep.subr.mxu0 0.0
    %376 = vmatpush1.msra.mxu0 0.0
    %377 = vmatprep.subr.mxu0 0.0
    %378 = vmatpush1.msra.mxu0 0.0
    %379 = vmatprep.subr.mxu0 0.0
    %380 = vmatpush1.msra.mxu0 0.0
    %381 = vmatprep.subr.mxu0 0.0
    %382 = vmatpush1.msra.mxu0 0.0
    %383 = vmatprep.subr.mxu0 0.0
    %384 = vmatpush1.msra.mxu0 0.0
    %385 = vmatprep.subr.mxu0 0.0
    %386 = vmatpush1.msra.mxu0 0.0
    %387 = vmatprep.subr.mxu0 0.0
    %388 = vmatpush1.msra.mxu0 0.0
    %389 = vmatprep.subr.mxu0 0.0
    %390 = vmatpush1.msra.mxu0 0.0
    %391 = vmatprep.subr.mxu0 0.0
    %392 = vmatpush1.msra.mxu0 0.0
    %393 = vmatprep.subr.mxu0 0.0
    %394 = vmatpush1.msra.mxu0 0.0
    %395 = vmatprep.subr.mxu0 0.0
    %396 = vmatpush1.msra.mxu0 0.0
    %397 = vmatprep.subr.mxu0 0.0
    %398 = vmatpush1.msra.mxu0 0.0
    %399 = vmatprep.subr.mxu0 0.0
    %400 = vmatpush1.msra.mxu0 0.0
    %401 = vmatprep.subr.mxu0 0.0
    %402 = vmatpush1.msra.mxu0 0.0
    %403 = vmatprep.mubr.f32.mxu0 0.0
    %404 = vmatmul.mubr.f32.gmra.mrb[0].mxu0 %v300
    %v405 = vpop.f32.mrb[0].mxu0
    %v406 = vadd.f32 %v337, %v405
    %v407 = vpop.f32.mrb[0].mxu0
    %408 = vmatprep.mubr.f32.mxu0 0.0
    %409 = vmatmul.mubr.f32.gmra.mrb[0].mxu0 %v301
    %v410 = vpop.f32.mrb[0].mxu0
    %v411 = vadd.f32 %v337, %v410
    %v412 = vpop.f32.mrb[0].mxu0
    %413 = vmatprep.mubr.f32.mxu0 0.0
    %414 = vmatmul.mubr.f32.gmra.mrb[0].mxu0 %v302
    %v415 = vpop.f32.mrb[0].mxu0
    %v416 = vadd.f32 %v337, %v415
    %v417 = vpop.f32.mrb[0].mxu0
    %418 = vmatprep.mubr.f32.mxu0 0.0
    %419 = vmatmul.mubr.f32.gmra.mrb[0].mxu0 %v303
    %v420 = vpop.f32.mrb[0].mxu0
    %v421 = vadd.f32 %v337, %v420
    %v422 = vpop.f32.mrb[0].mxu0
    %423 = vmatprep.mubr.f32.mxu0 0.0
    %424 = vmatmul.mubr.f32.gmra.mrb[0].mxu0 %v304
    %v425 = vpop.f32.mrb[0].mxu0
    %v426 = vadd.f32 %v337, %v425
    %v427 = vpop.f32.mrb[0].mxu0
    %428 = vmatprep.mubr.f32.mxu0 0.0
    %429 = vmatmul.mubr.f32.gmra.mrb[0].mxu0 %v305
    %v430 = vpop.f32.mrb[0].mxu0
    %v431 = vadd.f32 %v337, %v430
    %v432 = vpop.f32.mrb[0].mxu0
    %433 = vmatprep.mubr.f32.mxu0 0.0
    %434 = vmatmul.mubr.f32.gmra.mrb[0].mxu0 %v306
    %v435 = vpop.f32.mrb[0].mxu0
    %v436 = vadd.f32 %v337, %v435
    %v437 = vpop.f32.mrb[0].mxu0
    %438 = vmatprep.mubr.f32.mxu0 0.0
    %439 = vmatmul.mubr.f32.gmra.mrb[0].mxu0 %v307
    %v440 = vpop.f32.mrb[0].mxu0
    %v441 = vadd.f32 %v337, %v440
    %v442 = vpop.f32.mrb[0].mxu0
    %443 = vmatprep.mubr.f32.mxu0 0.0
    %444 = vmatmul.mubr.f32.gmra.mrb[0].mxu0 %v308
    %v445 = vpop.f32.mrb[0].mxu0
    %v446 = vadd.f32 %v337, %v445
    %v447 = vpop.f32.mrb[0].mxu0
    %448 = vmatprep.mubr.f32.mxu0 0.0
    %449 = vmatmul.mubr.f32.gmra.mrb[0].mxu0 %v309
    %v450 = vpop.f32.mrb[0].mxu0
    %v451 = vadd.f32 %v337, %v450
    %v452 = vpop.f32.mrb[0].mxu0
    %453 = vmatprep.mubr.f32.mxu0 0.0
    %454 = vmatmul.mubr.f32.gmra.mrb[0].mxu0 %v310
    %v455 = vpop.f32.mrb[0].mxu0
    %v456 = vadd.f32 %v337, %v455
    %v457 = vpop.f32.mrb[0].mxu0
    %458 = vmatprep.mubr.f32.mxu0 0.0
    %459 = vmatmul.mubr.f32.gmra.mrb[0].mxu0 %v311
    %v460 = vpop.f32.mrb[0].mxu0
    %v461 = vadd.f32 %v337, %v460
    %v462 = vpop.f32.mrb[0].mxu0
    %463 = vmatprep.mubr.f32.mxu0 0.0
    %464 = vmatmul.mubr.f32.gmra.mrb[0].mxu0 %v312
    %v465 = vpop.f32.mrb[0].mxu0
    %v466 = vadd.f32 %v337, %v465
    %v467 = vpop.f32.mrb[0].mxu0
    %468 = vmatprep.mubr.f32.mxu0 0.0
    %469 = vmatmul.mubr.f32.gmra.mrb[0].mxu0 %v313
    %v470 = vpop.f32.mrb[0].mxu0
    %v471 = vadd.f32 %v337, %v470
    %v472 = vpop.f32.mrb[0].mxu0
    %473 = vmatprep.mubr.f32.mxu0 0.0
    %474 = vmatmul.mubr.f32.gmra.mrb[0].mxu0 %v314
    %v475 = vpop.f32.mrb[0].mxu0
    %v476 = vadd.f32 %v337, %v475
    %v477 = vpop.f32.mrb[0].mxu0
    %478 = vmatprep.mubr.f32.mxu0 0.0
    %479 = vmatmul.mubr.f32.gmra.mrb[0].mxu0 %v315
    %v480 = vpop.f32.mrb[0].mxu0
    %v481 = vadd.f32 %v337, %v480
    %v482 = vpop.f32.mrb[0].mxu0
    %483 = vdwg.mxu0
    %v484 = vmax.f32 %v406, 0.0
    %v485 = vmax.f32 %v411, 0.0
    %v486 = vmax.f32 %v416, 0.0
    %v487 = vmax.f32 %v421, 0.0
    %v488 = vmax.f32 %v426, 0.0
    %v489 = vmax.f32 %v431, 0.0
    %v490 = vmax.f32 %v436, 0.0
    %v491 = vmax.f32 %v441, 0.0
    %v492 = vmax.f32 %v446, 0.0
    %v493 = vmax.f32 %v451, 0.0
    %v494 = vmax.f32 %v456, 0.0
    %v495 = vmax.f32 %v461, 0.0
    %v496 = vmax.f32 %v466, 0.0
    %v497 = vmax.f32 %v471, 0.0
    %v498 = vmax.f32 %v476, 0.0
    %v499 = vmax.f32 %v481, 0.0
    %v500 = vld [vmem:[#allocation11] sm:$0xff]
    %v501 = vld [vmem:[#allocation11 + $0x8] sm:$0xff]
    %v502 = vld [vmem:[#allocation11 + $0x10] sm:$0xff]
    %v503 = vld [vmem:[#allocation11 + $0x18] sm:$0xff]
    %v504 = vld [vmem:[#allocation11 + $0x20] sm:$0xff]
    %v505 = vld [vmem:[#allocation11 + $0x28] sm:$0xff]
    %v506 = vld [vmem:[#allocation11 + $0x30] sm:$0xff]
    %v507 = vld [vmem:[#allocation11 + $0x38] sm:$0xff]
    %v508 = vld [vmem:[#allocation11 + $0x40] sm:$0xff]
    %v509 = vld [vmem:[#allocation11 + $0x48] sm:$0xff]
    %v510 = vld [vmem:[#allocation11 + $0x50] sm:$0xff]
    %v511 = vld [vmem:[#allocation11 + $0x58] sm:$0xff]
    %v512 = vld [vmem:[#allocation11 + $0x60] sm:$0xff]
    %v513 = vld [vmem:[#allocation11 + $0x68] sm:$0xff]
    %v514 = vld [vmem:[#allocation11 + $0x70] sm:$0xff]
    %v515 = vld [vmem:[#allocation11 + $0x78] sm:$0xff]
    %v516 = vld [vmem:[#allocation13] sm:$0x1]
    %v518 = vlaneseq
    %v519 = vshrl.u32 %v518, 7
    %v520 = vsub.s32 0, %v519
    %v521 = vrot.slane %v516, %v520
    %523 = vmatprep.subr.mxu0 0.0
    %524 = vmatpush1.msra.mxu0 %v500
    %525 = vmatprep.subr.mxu0 0.0
    %526 = vmatpush1.msra.mxu0 %v501
    %527 = vmatprep.subr.mxu0 0.0
    %528 = vmatpush1.msra.mxu0 %v502
    %529 = vmatprep.subr.mxu0 0.0
    %530 = vmatpush1.msra.mxu0 %v503
    %531 = vmatprep.subr.mxu0 0.0
    %532 = vmatpush1.msra.mxu0 %v504
    %533 = vmatprep.subr.mxu0 0.0
    %534 = vmatpush1.msra.mxu0 %v505
    %535 = vmatprep.subr.mxu0 0.0
    %536 = vmatpush1.msra.mxu0 %v506
    %537 = vmatprep.subr.mxu0 0.0
    %538 = vmatpush1.msra.mxu0 %v507
    %539 = vmatprep.subr.mxu0 0.0
    %540 = vmatpush1.msra.mxu0 %v508
    %541 = vmatprep.subr.mxu0 0.0
    %542 = vmatpush1.msra.mxu0 %v509
    %543 = vmatprep.subr.mxu0 0.0
    %544 = vmatpush1.msra.mxu0 %v510
    %545 = vmatprep.subr.mxu0 0.0
    %546 = vmatpush1.msra.mxu0 %v511
    %547 = vmatprep.subr.mxu0 0.0
    %548 = vmatpush1.msra.mxu0 %v512
    %549 = vmatprep.subr.mxu0 0.0
    %550 = vmatpush1.msra.mxu0 %v513
    %551 = vmatprep.subr.mxu0 0.0
    %552 = vmatpush1.msra.mxu0 %v514
    %553 = vmatprep.subr.mxu0 0.0
    %554 = vmatpush1.msra.mxu0 %v515
    %555 = vmatprep.subr.mxu0 0.0
    %556 = vmatpush1.msra.mxu0 0.0
    %557 = vmatprep.subr.mxu0 0.0
    %558 = vmatpush1.msra.mxu0 0.0
    %559 = vmatprep.subr.mxu0 0.0
    %560 = vmatpush1.msra.mxu0 0.0
    %561 = vmatprep.subr.mxu0 0.0
    %562 = vmatpush1.msra.mxu0 0.0
    %563 = vmatprep.subr.mxu0 0.0
    %564 = vmatpush1.msra.mxu0 0.0
    %565 = vmatprep.subr.mxu0 0.0
    %566 = vmatpush1.msra.mxu0 0.0
    %567 = vmatprep.subr.mxu0 0.0
    %568 = vmatpush1.msra.mxu0 0.0
    %569 = vmatprep.subr.mxu0 0.0
    %570 = vmatpush1.msra.mxu0 0.0
    %571 = vmatprep.subr.mxu0 0.0
    %572 = vmatpush1.msra.mxu0 0.0
    %573 = vmatprep.subr.mxu0 0.0
    %574 = vmatpush1.msra.mxu0 0.0
    %575 = vmatprep.subr.mxu0 0.0
    %576 = vmatpush1.msra.mxu0 0.0
    %577 = vmatprep.subr.mxu0 0.0
    %578 = vmatpush1.msra.mxu0 0.0
    %579 = vmatprep.subr.mxu0 0.0
    %580 = vmatpush1.msra.mxu0 0.0
    %581 = vmatprep.subr.mxu0 0.0
    %582 = vmatpush1.msra.mxu0 0.0
    %583 = vmatprep.subr.mxu0 0.0
    %584 = vmatpush1.msra.mxu0 0.0
    %585 = vmatprep.subr.mxu0 0.0
    %586 = vmatpush1.msra.mxu0 0.0
    %587 = vmatprep.mubr.f32.mxu0 0.0
    %588 = vmatmul.mubr.f32.gmra.mrb[0].mxu0 %v484
    %v589 = vpop.f32.mrb[0].mxu0
    %v590 = vadd.f32 %v521, %v589
    %v591 = vpop.f32.mrb[0].mxu0
    %592 = vmatprep.mubr.f32.mxu0 0.0
    %593 = vmatmul.mubr.f32.gmra.mrb[0].mxu0 %v485
    %v594 = vpop.f32.mrb[0].mxu0
    %v595 = vadd.f32 %v521, %v594
    %v596 = vpop.f32.mrb[0].mxu0
    %597 = vmatprep.mubr.f32.mxu0 0.0
    %598 = vmatmul.mubr.f32.gmra.mrb[0].mxu0 %v486
    %v599 = vpop.f32.mrb[0].mxu0
    %v600 = vadd.f32 %v521, %v599
    %v601 = vpop.f32.mrb[0].mxu0
    %602 = vmatprep.mubr.f32.mxu0 0.0
    %603 = vmatmul.mubr.f32.gmra.mrb[0].mxu0 %v487
    %v604 = vpop.f32.mrb[0].mxu0
    %v605 = vadd.f32 %v521, %v604
    %v606 = vpop.f32.mrb[0].mxu0
    %607 = vmatprep.mubr.f32.mxu0 0.0
    %608 = vmatmul.mubr.f32.gmra.mrb[0].mxu0 %v488
    %v609 = vpop.f32.mrb[0].mxu0
    %v610 = vadd.f32 %v521, %v609
    %v611 = vpop.f32.mrb[0].mxu0
    %612 = vmatprep.mubr.f32.mxu0 0.0
    %613 = vmatmul.mubr.f32.gmra.mrb[0].mxu0 %v489
    %v614 = vpop.f32.mrb[0].mxu0
    %v615 = vadd.f32 %v521, %v614
    %v616 = vpop.f32.mrb[0].mxu0
    %617 = vmatprep.mubr.f32.mxu0 0.0
    %618 = vmatmul.mubr.f32.gmra.mrb[0].mxu0 %v490
    %v619 = vpop.f32.mrb[0].mxu0
    %v620 = vadd.f32 %v521, %v619
    %v621 = vpop.f32.mrb[0].mxu0
    %622 = vmatprep.mubr.f32.mxu0 0.0
    %623 = vmatmul.mubr.f32.gmra.mrb[0].mxu0 %v491
    %v624 = vpop.f32.mrb[0].mxu0
    %v625 = vadd.f32 %v521, %v624
    %v626 = vpop.f32.mrb[0].mxu0
    %627 = vmatprep.mubr.f32.mxu0 0.0
    %628 = vmatmul.mubr.f32.gmra.mrb[0].mxu0 %v492
    %v629 = vpop.f32.mrb[0].mxu0
    %v630 = vadd.f32 %v521, %v629
    %v631 = vpop.f32.mrb[0].mxu0
    %632 = vmatprep.mubr.f32.mxu0 0.0
    %633 = vmatmul.mubr.f32.gmra.mrb[0].mxu0 %v493
    %v634 = vpop.f32.mrb[0].mxu0
    %v635 = vadd.f32 %v521, %v634
    %v636 = vpop.f32.mrb[0].mxu0
    %637 = vmatprep.mubr.f32.mxu0 0.0
    %638 = vmatmul.mubr.f32.gmra.mrb[0].mxu0 %v494
    %v639 = vpop.f32.mrb[0].mxu0
    %v640 = vadd.f32 %v521, %v639
    %v641 = vpop.f32.mrb[0].mxu0
    %642 = vmatprep.mubr.f32.mxu0 0.0
    %643 = vmatmul.mubr.f32.gmra.mrb[0].mxu0 %v495
    %v644 = vpop.f32.mrb[0].mxu0
    %v645 = vadd.f32 %v521, %v644
    %v646 = vpop.f32.mrb[0].mxu0
    %647 = vmatprep.mubr.f32.mxu0 0.0
    %648 = vmatmul.mubr.f32.gmra.mrb[0].mxu0 %v496
    %v649 = vpop.f32.mrb[0].mxu0
    %v650 = vadd.f32 %v521, %v649
    %v651 = vpop.f32.mrb[0].mxu0
    %652 = vmatprep.mubr.f32.mxu0 0.0
    %653 = vmatmul.mubr.f32.gmra.mrb[0].mxu0 %v497
    %v654 = vpop.f32.mrb[0].mxu0
    %v655 = vadd.f32 %v521, %v654
    %v656 = vpop.f32.mrb[0].mxu0
    %657 = vmatprep.mubr.f32.mxu0 0.0
    %658 = vmatmul.mubr.f32.gmra.mrb[0].mxu0 %v498
    %v659 = vpop.f32.mrb[0].mxu0
    %v660 = vadd.f32 %v521, %v659
    %v661 = vpop.f32.mrb[0].mxu0
    %662 = vmatprep.mubr.f32.mxu0 0.0
    %663 = vmatmul.mubr.f32.gmra.mrb[0].mxu0 %v499
    %v664 = vpop.f32.mrb[0].mxu0
    %v665 = vadd.f32 %v521, %v664
    %v666 = vpop.f32.mrb[0].mxu0
    %667 = vdwg.mxu0
    %v668 = vmax.f32 %v590, 0.0
    %v669 = vmax.f32 %v595, 0.0
    %v670 = vmax.f32 %v600, 0.0
    %v671 = vmax.f32 %v605, 0.0
    %v672 = vmax.f32 %v610, 0.0
    %v673 = vmax.f32 %v615, 0.0
    %v674 = vmax.f32 %v620, 0.0
    %v675 = vmax.f32 %v625, 0.0
    %v676 = vmax.f32 %v630, 0.0
    %v677 = vmax.f32 %v635, 0.0
    %v678 = vmax.f32 %v640, 0.0
    %v679 = vmax.f32 %v645, 0.0
    %v680 = vmax.f32 %v650, 0.0
    %v681 = vmax.f32 %v655, 0.0
    %v682 = vmax.f32 %v660, 0.0
    %v683 = vmax.f32 %v665, 0.0
    %684 = vst [vmem:[#allocation14] sm:$0xff] %v668
    %685 = vst [vmem:[#allocation14 + $0x8] sm:$0xff] %v669
    %686 = vst [vmem:[#allocation14 + $0x10] sm:$0xff] %v670
    %687 = vst [vmem:[#allocation14 + $0x18] sm:$0xff] %v671
    %688 = vst [vmem:[#allocation14 + $0x20] sm:$0xff] %v672
    %689 = vst [vmem:[#allocation14 + $0x28] sm:$0xff] %v673
    %690 = vst [vmem:[#allocation14 + $0x30] sm:$0xff] %v674
    %691 = vst [vmem:[#allocation14 + $0x38] sm:$0xff] %v675
    %692 = vst [vmem:[#allocation14 + $0x40] sm:$0xff] %v676
    %693 = vst [vmem:[#allocation14 + $0x48] sm:$0xff] %v677
    %694 = vst [vmem:[#allocation14 + $0x50] sm:$0xff] %v678
    %695 = vst [vmem:[#allocation14 + $0x58] sm:$0xff] %v679
    %696 = vst [vmem:[#allocation14 + $0x60] sm:$0xff] %v680
    %697 = vst [vmem:[#allocation14 + $0x68] sm:$0xff] %v681
    %698 = vst [vmem:[#allocation14 + $0x70] sm:$0xff] %v682
    %699 = vst [vmem:[#allocation14 + $0x78] sm:$0xff] %v683
    // Predicated region
    $region58: #{encoder_forward.1} parent=1 // pred_check
      _
    $region59: #{encoder_forward.1} parent=1 // pred_check_branch
      %701 = sbr.rel (0) target = $region61
    $region60: #{encoder_forward.1} parent=1 // pred_region
      %s703 = ssub.s32 2048, 2048
      %704 = vsyncadd [#allocation4], %s703
      %s705 = sshll.u32 [#allocation14], 4
      %s706 = int_to_ptr.vmem [resolvable:$true] %s705
      %711 = dma.vmem_to_hbm [thread:$0]  %s706, 2048, %s7, [#allocation4], 128, 128, 8
    $region61: #{encoder_forward.1} parent=1 // pred_fallthru
      _
    // Predicated region
    $region62: #{encoder_forward.1} parent=1 // pred_check
      _
    $region63: #{encoder_forward.1} parent=1 // pred_check_branch
      %713 = sbr.rel (0) target = $region65
    $region64: #{encoder_forward.1} parent=1 // pred_region
      %714 = dma.done [#allocation4], 2048
    $region65: #{encoder_forward.1} parent=1 // pred_fallthru
      _
    %715 = vsyncpa [#allocation3], 1
    %716 = vsyncpa [#allocation6], 1
    %717 = vsyncpa [#allocation9], 1
    %718 = vsyncpa [#allocation12], 1
    %719 = vsyncpa [#allocation4], 1

</llo_original>
